<compile_context>
chip_gen: v7x
topology: tpu7x:2x2x1
jax: 0.10.0
libtpu: 0.0.40
codegen_flags: <defaults>
</compile_context>

<pallas_src>
import jax
import jax.numpy as jnp
from jax.experimental import pallas as pl
from jax.experimental.pallas import tpu as pltpu

# ---- "config" (small, deterministic) ----
BATCH = 2
C_IN = 4
H = W = 16
C_FEAT = 32           # backbone.out_features
EMB = 32              # config.embedding_size
NUM_CLASSES = 16      # config.num_classes
PAD_CLASSES = 128     # lane-dense output width (sliced back in the wrapper)
GEM_P = 3.0           # GeM p (p_trainable parameter value at init)
GEM_EPS = 1e-6
PRELU_A = 0.25        # PReLU default init
BN_EPS = 1e-5


def net_kernel(patches_ref, wc_ref, bc_ref, avg_ref, w1_ref, b1_ref, wn_ref, out_ref):
    # ---- backbone stand-in: 3x3 conv (im2col matmul, bf16 operands, f32 acc) + ReLU ----
    conv = jnp.dot(patches_ref[...], wc_ref[...],
                   preferred_element_type=jnp.float32)          # (bs*H*W, C_feat) f32
    feat = jnp.maximum(conv + bc_ref[...], 0.0)

    # ---- GeM pooling: (mean(clamp(x, eps)^p over H*W))^(1/p), p = 3 (constant) ----
    clamped = jnp.maximum(feat, GEM_EPS)
    pow3 = clamped * clamped * clamped                          # VPU mults, no EUP
    # spatial mean as an MXU block-averaging matmul: keeps lane-dense layout, no reshape
    pooled = jnp.dot(avg_ref[...], pow3,
                     preferred_element_type=jnp.float32)        # (bs, C_feat)
    pooled = jnp.exp(jnp.log(pooled) * (1.0 / GEM_P))           # tiny cbrt (pooled >= eps^3)

    # ---- neck: Linear with eval-mode BN folded in -> PReLU ----
    emb = jnp.dot(pooled, w1_ref[...],
                  preferred_element_type=jnp.float32) + b1_ref[...]
    emb = jnp.where(emb > 0, emb, PRELU_A * emb)

    # ---- ArcMarginProduct head: cosine logits = normalize(x) @ pre-normalized(W) ----
    inv_norm = jax.lax.rsqrt(
        jnp.maximum(jnp.sum(emb * emb, axis=-1, keepdims=True), 1e-24))
    xn = emb * inv_norm
    out_ref[...] = jnp.dot(xn, wn_ref[...],
                           preferred_element_type=jnp.float32)  # (bs, PAD_CLASSES)


def net_forward(x_nchw, params):
    bs, cin, h, w = x_nchw.shape
    hw = h * w

    # NCHW -> NHWC, pad, im2col (pure layout glue stays in JAX)
    x = jnp.transpose(x_nchw, (0, 2, 3, 1)).astype(jnp.float32)       # (bs, H, W, C_in)
    xp = jnp.pad(x, ((0, 0), (1, 1), (1, 1), (0, 0)))
    cols = [xp[:, dy:dy + h, dx:dx + w, :] for dy in range(3) for dx in range(3)]
    patches = jnp.concatenate(cols, axis=-1).reshape(bs * hw, 9 * cin)
    patches = patches.astype(jnp.bfloat16)                            # MXU operand only

    wc = params["wconv"].reshape(9 * cin, C_FEAT).astype(jnp.bfloat16)
    bc = params["bconv"]                                              # (1, C_FEAT) f32

    # block-averaging matrix for the GeM spatial mean (MXU reduction)
    avg = jnp.repeat(jnp.eye(bs, dtype=jnp.float32), hw, axis=1) / float(hw)  # (bs, bs*hw)

    # fold eval-mode BatchNorm1d into the neck Linear
    bn_scale = params["bn_gamma"] / jnp.sqrt(params["bn_var"] + BN_EPS)       # (EMB,)
    bn_shift = params["bn_beta"] - params["bn_mean"] * bn_scale
    w1f = params["w1"] * bn_scale[None, :]                                    # (C_FEAT, EMB)
    b1f = (params["b1"][0] * bn_scale + bn_shift).reshape(1, EMB)

    # pre-normalize ArcMargin weight column-wise, then lane-pad 16 -> 128 with zeros
    warc = params["warc"]                                                     # (EMB, NUM_CLASSES)
    wnorm = jnp.maximum(jnp.sqrt(jnp.sum(warc * warc, axis=0, keepdims=True)), 1e-12)
    wn = warc / wnorm
    wn_pad = jnp.pad(wn, ((0, 0), (0, PAD_CLASSES - NUM_CLASSES)))            # (EMB, 128)

    vmem = pl.BlockSpec(memory_space=pltpu.MemorySpace.VMEM)
    logits_pad = pl.pallas_call(
        net_kernel,
        out_shape=jax.ShapeDtypeStruct((bs, PAD_CLASSES), jnp.float32),
        in_specs=[vmem, vmem, vmem, vmem, vmem, vmem, vmem],
        out_specs=vmem,
    )(patches, wc, bc, avg, w1f, b1f, wn_pad)

    return logits_pad[:, :NUM_CLASSES]


def init_params(key):
    ks = jax.random.split(key, 9)
    return {
        "wconv": 0.1 * jax.random.normal(ks[0], (3, 3, C_IN, C_FEAT), jnp.float32),
        "bconv": 0.01 * jax.random.normal(ks[1], (1, C_FEAT), jnp.float32),
        "w1": 0.1 * jax.random.normal(ks[2], (C_FEAT, EMB), jnp.float32),
        "b1": 0.01 * jax.random.normal(ks[3], (1, EMB), jnp.float32),
        "bn_gamma": 1.0 + 0.1 * jax.random.normal(ks[4], (EMB,), jnp.float32),
        "bn_beta": 0.1 * jax.random.normal(ks[5], (EMB,), jnp.float32),
        "bn_mean": 0.1 * jax.random.normal(ks[6], (EMB,), jnp.float32),
        "bn_var": 1.0 + 0.1 * jnp.abs(jax.random.normal(ks[7], (EMB,), jnp.float32)),
        "warc": 0.1 * jax.random.normal(ks[8], (EMB, NUM_CLASSES), jnp.float32),
    }


if __name__ == "__main__":
    key = jax.random.PRNGKey(0)
    k_x, k_p = jax.random.split(key)
    x = jax.random.normal(k_x, (BATCH, C_IN, H, W), jnp.float32)   # NCHW, like PyTorch
    params = init_params(k_p)

    logits = net_forward(x, params)
    jax.block_until_ready(logits)
    assert logits.shape == (BATCH, NUM_CLASSES)
    assert bool(jnp.all(jnp.isfinite(logits)))
    print("KERNEL_OK")
</pallas_src>

<mosaic_0001>
module attributes {stable_mosaic.version = 11 : i64} {
  func.func @net_kernel(%arg0: memref<512x36xbf16, #tpu.memory_space<vmem>>, %arg1: memref<36x32xbf16, #tpu.memory_space<vmem>>, %arg2: memref<1x32xf32, #tpu.memory_space<vmem>>, %arg3: memref<2x512xf32, #tpu.memory_space<vmem>>, %arg4: memref<32x32xf32, #tpu.memory_space<vmem>>, %arg5: memref<1x32xf32, #tpu.memory_space<vmem>>, %arg6: memref<32x128xf32, #tpu.memory_space<vmem>>, %arg7: memref<2x128xf32, #tpu.memory_space<vmem>>) attributes {dimension_semantics = [], scalar_prefetch = 0 : i64, scratch_operands = 0 : i64, tpu.core_type = #tpu.core_type<tc>} {
    %c0 = arith.constant 0 : index
    %c0_0 = arith.constant 0 : index
    %0 = vector.load %arg0[%c0, %c0_0] : memref<512x36xbf16, #tpu.memory_space<vmem>>, vector<512x36xbf16>
    %c0_1 = arith.constant 0 : index
    %c0_2 = arith.constant 0 : index
    %1 = vector.load %arg1[%c0_1, %c0_2] : memref<36x32xbf16, #tpu.memory_space<vmem>>, vector<36x32xbf16>
    %cst = arith.constant dense<0.000000e+00> : vector<512x32xf32>
    %2 = tpu.matmul %0, %1, %cst {dimension_numbers = #tpu.dot_dimension_numbers<[1], [0], [0], [1], [0, 0, 1, 1], [], []>} : vector<512x36xbf16>, vector<36x32xbf16>, vector<512x32xf32> -> vector<512x32xf32>
    %c0_3 = arith.constant 0 : index
    %c0_4 = arith.constant 0 : index
    %3 = vector.load %arg2[%c0_3, %c0_4] : memref<1x32xf32, #tpu.memory_space<vmem>>, vector<1x32xf32>
    %4 = vector.broadcast %3 : vector<1x32xf32> to vector<512x32xf32>
    %5 = arith.addf %2, %4 : vector<512x32xf32>
    %cst_5 = arith.constant 0.000000e+00 : f32
    %6 = vector.broadcast %cst_5 : f32 to vector<512x32xf32>
    %7 = arith.maximumf %5, %6 : vector<512x32xf32>
    %cst_6 = arith.constant 9.99999997E-7 : f32
    %8 = vector.broadcast %cst_6 : f32 to vector<512x32xf32>
    %9 = arith.maximumf %7, %8 : vector<512x32xf32>
    %10 = arith.mulf %9, %9 : vector<512x32xf32>
    %11 = arith.mulf %10, %9 : vector<512x32xf32>
    %c0_7 = arith.constant 0 : index
    %c0_8 = arith.constant 0 : index
    %12 = vector.load %arg3[%c0_7, %c0_8] : memref<2x512xf32, #tpu.memory_space<vmem>>, vector<2x512xf32>
    %cst_9 = arith.constant dense<0.000000e+00> : vector<2x32xf32>
    %13 = tpu.matmul %12, %11, %cst_9 {dimension_numbers = #tpu.dot_dimension_numbers<[1], [0], [0], [1], [0, 0, 1, 1], [], []>} : vector<2x512xf32>, vector<512x32xf32>, vector<2x32xf32> -> vector<2x32xf32>
    %14 = math.log %13 : vector<2x32xf32>
    %cst_10 = arith.constant 0.333333343 : f32
    %15 = vector.broadcast %cst_10 : f32 to vector<2x32xf32>
    %16 = arith.mulf %14, %15 : vector<2x32xf32>
    %17 = math.exp %16 : vector<2x32xf32>
    %c0_11 = arith.constant 0 : index
    %c0_12 = arith.constant 0 : index
    %18 = vector.load %arg4[%c0_11, %c0_12] : memref<32x32xf32, #tpu.memory_space<vmem>>, vector<32x32xf32>
    %cst_13 = arith.constant dense<0.000000e+00> : vector<2x32xf32>
    %19 = tpu.matmul %17, %18, %cst_13 {dimension_numbers = #tpu.dot_dimension_numbers<[1], [0], [0], [1], [0, 0, 1, 1], [], []>} : vector<2x32xf32>, vector<32x32xf32>, vector<2x32xf32> -> vector<2x32xf32>
    %c0_14 = arith.constant 0 : index
    %c0_15 = arith.constant 0 : index
    %20 = vector.load %arg5[%c0_14, %c0_15] : memref<1x32xf32, #tpu.memory_space<vmem>>, vector<1x32xf32>
    %21 = vector.broadcast %20 : vector<1x32xf32> to vector<2x32xf32>
    %22 = arith.addf %19, %21 : vector<2x32xf32>
    %cst_16 = arith.constant 0.000000e+00 : f32
    %23 = vector.broadcast %cst_16 : f32 to vector<2x32xf32>
    %24 = arith.cmpf ogt, %22, %23 : vector<2x32xf32>
    %cst_17 = arith.constant 2.500000e-01 : f32
    %25 = vector.broadcast %cst_17 : f32 to vector<2x32xf32>
    %26 = arith.mulf %25, %22 : vector<2x32xf32>
    %27 = arith.select %24, %22, %26 : vector<2x32xi1>, vector<2x32xf32>
    %28 = arith.mulf %27, %27 : vector<2x32xf32>
    %cst_18 = arith.constant dense<0.000000e+00> : vector<2xf32>
    %29 = vector.multi_reduction <add>, %28, %cst_18 [1] : vector<2x32xf32> to vector<2xf32>
    %30 = vector.shape_cast %29 : vector<2xf32> to vector<2x1xf32>
    %cst_19 = arith.constant 1.000000e-24 : f32
    %31 = vector.broadcast %cst_19 : f32 to vector<2x1xf32>
    %32 = arith.maximumf %30, %31 : vector<2x1xf32>
    %33 = math.rsqrt %32 : vector<2x1xf32>
    %34 = vector.broadcast %33 : vector<2x1xf32> to vector<2x32xf32>
    %35 = arith.mulf %27, %34 : vector<2x32xf32>
    %c0_20 = arith.constant 0 : index
    %c0_21 = arith.constant 0 : index
    %36 = vector.load %arg6[%c0_20, %c0_21] : memref<32x128xf32, #tpu.memory_space<vmem>>, vector<32x128xf32>
    %cst_22 = arith.constant dense<0.000000e+00> : vector<2x128xf32>
    %37 = tpu.matmul %35, %36, %cst_22 {dimension_numbers = #tpu.dot_dimension_numbers<[1], [0], [0], [1], [0, 0, 1, 1], [], []>} : vector<2x32xf32>, vector<32x128xf32>, vector<2x128xf32> -> vector<2x128xf32>
    %c0_23 = arith.constant 0 : index
    %c0_24 = arith.constant 0 : index
    %38 = vector.load %arg7[%c0_23, %c0_24] : memref<2x128xf32, #tpu.memory_space<vmem>>, vector<2x128xf32>
    tpu.vector_store %arg7[%c0_23, %c0_24], %37 {strides = array<i32>} : memref<2x128xf32, #tpu.memory_space<vmem>>, vector<2x128xf32>,
    return
  }
}

</mosaic_0001>

<llo_original>
// kernel: tpu_custom_call.1
$region0: #{tpu_custom_call.1}
  #allocation0 [shape = 'u32[]', space=smem, size = 0x4, offset = 0x4, fixed_abs, tag = 'smem constant byte address 0x4 - core index']
  #allocation1 [shape = 'u32[144,128]{1,0:T(1,128)}', space=vmem, size = 0x12000, scoped, tag = 'internal scratch']
  %s0 = inlined_call_operand.vmem [shape: bf16[512,36], index: 0, kind: input, shape index: {}]
  %s1 = inlined_call_operand.vmem [shape: bf16[36,32], index: 1, kind: input, shape index: {}]
  %s2 = inlined_call_operand.vmem [shape: f32[1,32], index: 2, kind: input, shape index: {}]
  %s3 = inlined_call_operand.vmem [shape: f32[2,512], index: 3, kind: input, shape index: {}]
  %s4 = inlined_call_operand.vmem [shape: f32[32,32], index: 4, kind: input, shape index: {}]
  %s5 = inlined_call_operand.vmem [shape: f32[1,32], index: 5, kind: input, shape index: {}]
  %s6 = inlined_call_operand.vmem [shape: f32[32,128], index: 6, kind: input, shape index: {}]
  %s7 = inlined_call_operand.hbm [shape: f32[2,128], index: 7, kind: output, shape index: {}]
  %s8 = sld [smem:[#allocation0]]
  $region38: #{tpu_custom_call.1} parent=0
    _
  %s10 = ssub.s32 1, %s8
  %s11 = scalar_select 0, %s10, %s8
  $region1: #{tpu_custom_call.1} parent=0
    #allocation2 [shape = 'u8[1024]{0}', space=vmem, size = 0x400, scoped, tag = 'output window, operand 0, single buffered']
    #allocation3 [shape = 's32[1]{0}', space=sflag, size = 0x4, scoped, tag = 'scoped memory for tpu_custom_call.1']
    %12 = vsyncpa [#allocation3], 0
    // Predicated region
    $region2: #{tpu_custom_call.1} parent=1 // pred_check
      _
    $region3: #{tpu_custom_call.1} parent=1 // pred_check_branch
      %14 = sbr.rel (0) target = $region5
    $region4: #{tpu_custom_call.1} parent=1 // pred_region
      _
    $region5: #{tpu_custom_call.1} parent=1 // pred_fallthru
      _
    // Predicated region
    $region6: #{tpu_custom_call.1} parent=1 // pred_check
      _
    $region7: #{tpu_custom_call.1} parent=1 // pred_check_branch
      %16 = sbr.rel (0) target = $region9
    $region8: #{tpu_custom_call.1} parent=1 // pred_region
      _
    $region9: #{tpu_custom_call.1} parent=1 // pred_fallthru
      _
    // Predicated region
    $region10: #{tpu_custom_call.1} parent=1 // pred_check
      _
    $region11: #{tpu_custom_call.1} parent=1 // pred_check_branch
      %18 = sbr.rel (0) target = $region13
    $region12: #{tpu_custom_call.1} parent=1 // pred_region
      _
    $region13: #{tpu_custom_call.1} parent=1 // pred_fallthru
      _
    // Predicated region
    $region14: #{tpu_custom_call.1} parent=1 // pred_check
      _
    $region15: #{tpu_custom_call.1} parent=1 // pred_check_branch
      %20 = sbr.rel (0) target = $region17
    $region16: #{tpu_custom_call.1} parent=1 // pred_region
      _
    $region17: #{tpu_custom_call.1} parent=1 // pred_fallthru
      _
    // Predicated region
    $region18: #{tpu_custom_call.1} parent=1 // pred_check
      _
    $region19: #{tpu_custom_call.1} parent=1 // pred_check_branch
      %22 = sbr.rel (0) target = $region21
    $region20: #{tpu_custom_call.1} parent=1 // pred_region
      _
    $region21: #{tpu_custom_call.1} parent=1 // pred_fallthru
      _
    // Predicated region
    $region22: #{tpu_custom_call.1} parent=1 // pred_check
      _
    $region23: #{tpu_custom_call.1} parent=1 // pred_check_branch
      %24 = sbr.rel (0) target = $region25
    $region24: #{tpu_custom_call.1} parent=1 // pred_region
      _
    $region25: #{tpu_custom_call.1} parent=1 // pred_fallthru
      _
    // Predicated region
    $region26: #{tpu_custom_call.1} parent=1 // pred_check
      _
    $region27: #{tpu_custom_call.1} parent=1 // pred_check_branch
      %26 = sbr.rel (0) target = $region29
    $region28: #{tpu_custom_call.1} parent=1 // pred_region
      _
    $region29: #{tpu_custom_call.1} parent=1 // pred_fallthru
      _
    %v28 = vld [vmem:[%s0] sm:$0xf]
    %v29 = vld [vmem:[%s0 + $0x4] sm:$0xf]
    %v30 = vld [vmem:[%s0 + $0x8] sm:$0xf]
    %v31 = vld [vmem:[%s0 + $0xc] sm:$0xf]
    %v32 = vld [vmem:[%s0 + $0x10] sm:$0xf]
    %v33 = vld [vmem:[%s0 + $0x14] sm:$0xf]
    %v34 = vld [vmem:[%s0 + $0x18] sm:$0xf]
    %v35 = vld [vmem:[%s0 + $0x1c] sm:$0xf]
    %v36 = vld [vmem:[%s0 + $0x20] sm:$0xf]
    %v37 = vld [vmem:[%s0 + $0x24] sm:$0xf]
    %v38 = vld [vmem:[%s0 + $0x28] sm:$0xf]
    %v39 = vld [vmem:[%s0 + $0x2c] sm:$0xf]
    %v40 = vld [vmem:[%s0 + $0x30] sm:$0xf]
    %v41 = vld [vmem:[%s0 + $0x34] sm:$0xf]
    %v42 = vld [vmem:[%s0 + $0x38] sm:$0xf]
    %v43 = vld [vmem:[%s0 + $0x3c] sm:$0xf]
    %v44 = vld [vmem:[%s0 + $0x40] sm:$0xf]
    %v45 = vld [vmem:[%s0 + $0x44] sm:$0xf]
    %v46 = vld [vmem:[%s0 + $0x48] sm:$0xf]
    %v47 = vld [vmem:[%s0 + $0x4c] sm:$0xf]
    %v48 = vld [vmem:[%s0 + $0x50] sm:$0xf]
    %v49 = vld [vmem:[%s0 + $0x54] sm:$0xf]
    %v50 = vld [vmem:[%s0 + $0x58] sm:$0xf]
    %v51 = vld [vmem:[%s0 + $0x5c] sm:$0xf]
    %v52 = vld [vmem:[%s0 + $0x60] sm:$0xf]
    %v53 = vld [vmem:[%s0 + $0x64] sm:$0xf]
    %v54 = vld [vmem:[%s0 + $0x68] sm:$0xf]
    %v55 = vld [vmem:[%s0 + $0x6c] sm:$0xf]
    %v56 = vld [vmem:[%s0 + $0x70] sm:$0xf]
    %v57 = vld [vmem:[%s0 + $0x74] sm:$0xf]
    %v58 = vld [vmem:[%s0 + $0x78] sm:$0xf]
    %v59 = vld [vmem:[%s0 + $0x7c] sm:$0xf]
    %v60 = vld [vmem:[%s0 + $0x80] sm:$0xf]
    %v61 = vld [vmem:[%s0 + $0x84] sm:$0xf]
    %v62 = vld [vmem:[%s0 + $0x88] sm:$0xf]
    %v63 = vld [vmem:[%s0 + $0x8c] sm:$0xf]
    %v64 = vld [vmem:[%s0 + $0x90] sm:$0xf]
    %v65 = vld [vmem:[%s0 + $0x94] sm:$0xf]
    %v66 = vld [vmem:[%s0 + $0x98] sm:$0xf]
    %v67 = vld [vmem:[%s0 + $0x9c] sm:$0xf]
    %v68 = vld [vmem:[%s0 + $0xa0] sm:$0xf]
    %v69 = vld [vmem:[%s0 + $0xa4] sm:$0xf]
    %v70 = vld [vmem:[%s0 + $0xa8] sm:$0xf]
    %v71 = vld [vmem:[%s0 + $0xac] sm:$0xf]
    %v72 = vld [vmem:[%s0 + $0xb0] sm:$0xf]
    %v73 = vld [vmem:[%s0 + $0xb4] sm:$0xf]
    %v74 = vld [vmem:[%s0 + $0xb8] sm:$0xf]
    %v75 = vld [vmem:[%s0 + $0xbc] sm:$0xf]
    %v76 = vld [vmem:[%s0 + $0xc0] sm:$0xf]
    %v77 = vld [vmem:[%s0 + $0xc4] sm:$0xf]
    %v78 = vld [vmem:[%s0 + $0xc8] sm:$0xf]
    %v79 = vld [vmem:[%s0 + $0xcc] sm:$0xf]
    %v80 = vld [vmem:[%s0 + $0xd0] sm:$0xf]
    %v81 = vld [vmem:[%s0 + $0xd4] sm:$0xf]
    %v82 = vld [vmem:[%s0 + $0xd8] sm:$0xf]
    %v83 = vld [vmem:[%s0 + $0xdc] sm:$0xf]
    %v84 = vld [vmem:[%s0 + $0xe0] sm:$0xf]
    %v85 = vld [vmem:[%s0 + $0xe4] sm:$0xf]
    %v86 = vld [vmem:[%s0 + $0xe8] sm:$0xf]
    %v87 = vld [vmem:[%s0 + $0xec] sm:$0xf]
    %v88 = vld [vmem:[%s0 + $0xf0] sm:$0xf]
    %v89 = vld [vmem:[%s0 + $0xf4] sm:$0xf]
    %v90 = vld [vmem:[%s0 + $0xf8] sm:$0xf]
    %v91 = vld [vmem:[%s0 + $0xfc] sm:$0xf]
    %v92 = vld [vmem:[%s1] sm:$0xf]
    %v93 = vld [vmem:[%s1 + $0x4] sm:$0xf]
    %v94 = vld [vmem:[%s1 + $0x8] sm:$0xf]
    %v95 = vld [vmem:[%s1 + $0xc] sm:$0xf]
    %v96 = vld [vmem:[%s1 + $0x10] sm:$0x3]
    %v97 = vld [vmem:[%s2] sm:$0x1]
    %v99 = vlaneseq
    %v100 = vshrl.u32 %v99, 7
    %v101 = vsub.s32 0, %v100
    %v102 = vrot.slane %v97, %v101
    %v168 = vunpack.c.l.b16 %v28
    %v169 = vunpack.c.l.b16 %v29
    %v170 = vunpack.c.l.b16 %v30
    %v171 = vunpack.c.l.b16 %v31
    %v172 = vunpack.c.l.b16 %v32
    %v173 = vunpack.c.l.b16 %v33
    %v174 = vunpack.c.l.b16 %v34
    %v175 = vunpack.c.l.b16 %v35
    %v176 = vunpack.c.l.b16 %v36
    %v177 = vunpack.c.l.b16 %v37
    %v178 = vunpack.c.l.b16 %v38
    %v179 = vunpack.c.l.b16 %v39
    %v180 = vunpack.c.l.b16 %v40
    %v181 = vunpack.c.l.b16 %v41
    %v182 = vunpack.c.l.b16 %v42
    %v183 = vunpack.c.l.b16 %v43
    %v184 = vunpack.c.l.b16 %v44
    %v185 = vunpack.c.l.b16 %v45
    %v186 = vunpack.c.l.b16 %v46
    %v187 = vunpack.c.l.b16 %v47
    %v188 = vunpack.c.l.b16 %v48
    %v189 = vunpack.c.l.b16 %v49
    %v190 = vunpack.c.l.b16 %v50
    %v191 = vunpack.c.l.b16 %v51
    %v192 = vunpack.c.l.b16 %v52
    %v193 = vunpack.c.l.b16 %v53
    %v194 = vunpack.c.l.b16 %v54
    %v195 = vunpack.c.l.b16 %v55
    %v196 = vunpack.c.l.b16 %v56
    %v197 = vunpack.c.l.b16 %v57
    %v198 = vunpack.c.l.b16 %v58
    %v199 = vunpack.c.l.b16 %v59
    %v200 = vunpack.c.l.b16 %v60
    %v201 = vunpack.c.l.b16 %v61
    %v202 = vunpack.c.l.b16 %v62
    %v203 = vunpack.c.l.b16 %v63
    %v204 = vunpack.c.l.b16 %v64
    %v205 = vunpack.c.l.b16 %v65
    %v206 = vunpack.c.l.b16 %v66
    %v207 = vunpack.c.l.b16 %v67
    %v208 = vunpack.c.l.b16 %v68
    %v209 = vunpack.c.l.b16 %v69
    %v210 = vunpack.c.l.b16 %v70
    %v211 = vunpack.c.l.b16 %v71
    %v212 = vunpack.c.l.b16 %v72
    %v213 = vunpack.c.l.b16 %v73
    %v214 = vunpack.c.l.b16 %v74
    %v215 = vunpack.c.l.b16 %v75
    %v216 = vunpack.c.l.b16 %v76
    %v217 = vunpack.c.l.b16 %v77
    %v218 = vunpack.c.l.b16 %v78
    %v219 = vunpack.c.l.b16 %v79
    %v220 = vunpack.c.l.b16 %v80
    %v221 = vunpack.c.l.b16 %v81
    %v222 = vunpack.c.l.b16 %v82
    %v223 = vunpack.c.l.b16 %v83
    %v224 = vunpack.c.l.b16 %v84
    %v225 = vunpack.c.l.b16 %v85
    %v226 = vunpack.c.l.b16 %v86
    %v227 = vunpack.c.l.b16 %v87
    %v228 = vunpack.c.l.b16 %v88
    %v229 = vunpack.c.l.b16 %v89
    %v230 = vunpack.c.l.b16 %v90
    %v231 = vunpack.c.l.b16 %v91
    %v232 = vpack.c.b16 %v169, %v168
    %v233 = vpack.c.b16 %v171, %v170
    %v234 = vpack.c.b16 %v173, %v172
    %v235 = vpack.c.b16 %v175, %v174
    %v236 = vpack.c.b16 %v177, %v176
    %v237 = vpack.c.b16 %v179, %v178
    %v238 = vpack.c.b16 %v181, %v180
    %v239 = vpack.c.b16 %v183, %v182
    %v240 = vpack.c.b16 %v185, %v184
    %v241 = vpack.c.b16 %v187, %v186
    %v242 = vpack.c.b16 %v189, %v188
    %v243 = vpack.c.b16 %v191, %v190
    %v244 = vpack.c.b16 %v193, %v192
    %v245 = vpack.c.b16 %v195, %v194
    %v246 = vpack.c.b16 %v197, %v196
    %v247 = vpack.c.b16 %v199, %v198
    %v248 = vpack.c.b16 %v201, %v200
    %v249 = vpack.c.b16 %v203, %v202
    %v250 = vpack.c.b16 %v205, %v204
    %v251 = vpack.c.b16 %v207, %v206
    %v252 = vpack.c.b16 %v209, %v208
    %v253 = vpack.c.b16 %v211, %v210
    %v254 = vpack.c.b16 %v213, %v212
    %v255 = vpack.c.b16 %v215, %v214
    %v256 = vpack.c.b16 %v217, %v216
    %v257 = vpack.c.b16 %v219, %v218
    %v258 = vpack.c.b16 %v221, %v220
    %v259 = vpack.c.b16 %v223, %v222
    %v260 = vpack.c.b16 %v225, %v224
    %v261 = vpack.c.b16 %v227, %v226
    %v262 = vpack.c.b16 %v229, %v228
    %v263 = vpack.c.b16 %v231, %v230
    %v269 = vunpack.c.l.b16 %v92
    %v270 = vunpack.c.l.b16 %v93
    %v271 = vunpack.c.l.b16 %v94
    %v272 = vunpack.c.l.b16 %v95
    %v273 = vunpack.c.l.b16 %v96
    %v274 = vpack.c.b16 %v270, %v269
    %v275 = vpack.c.b16 %v272, %v271
    %v276 = vpack.c.b16 %v273, %v273
    %vm279 = vcmask 293888
    %v281 = vsel %vm279, %v232, 0
    %v284 = vsel %vm279, %v233, 0
    %v287 = vsel %vm279, %v234, 0
    %v290 = vsel %vm279, %v235, 0
    %v293 = vsel %vm279, %v236, 0
    %v296 = vsel %vm279, %v237, 0
    %v299 = vsel %vm279, %v238, 0
    %v302 = vsel %vm279, %v239, 0
    %v305 = vsel %vm279, %v240, 0
    %v308 = vsel %vm279, %v241, 0
    %v311 = vsel %vm279, %v242, 0
    %v314 = vsel %vm279, %v243, 0
    %v317 = vsel %vm279, %v244, 0
    %v320 = vsel %vm279, %v245, 0
    %v323 = vsel %vm279, %v246, 0
    %v326 = vsel %vm279, %v247, 0
    %v329 = vsel %vm279, %v248, 0
    %v332 = vsel %vm279, %v249, 0
    %v335 = vsel %vm279, %v250, 0
    %v338 = vsel %vm279, %v251, 0
    %v341 = vsel %vm279, %v252, 0
    %v344 = vsel %vm279, %v253, 0
    %v347 = vsel %vm279, %v254, 0
    %v350 = vsel %vm279, %v255, 0
    %v353 = vsel %vm279, %v256, 0
    %v356 = vsel %vm279, %v257, 0
    %v359 = vsel %vm279, %v258, 0
    %v362 = vsel %vm279, %v259, 0
    %v365 = vsel %vm279, %v260, 0
    %v368 = vsel %vm279, %v261, 0
    %v371 = vsel %vm279, %v262, 0
    %v374 = vsel %vm279, %v263, 0
    %vm376 = vcmask 1041408
    %v378 = vsel %vm376, %v276, 0
    %380 = vmatprep.subr.bf16.mxu0 0
    %381 = vmatpush1.bf16.msra.mxu0 %v274
    %382 = vmatprep.subr.bf16.mxu0 0
    %383 = vmatpush1.bf16.msra.mxu0 %v275
    %384 = vmatprep.subr.bf16.mxu0 0
    %385 = vmatpush1.bf16.msra.mxu0 %v378
    %386 = vmatprep.subr.bf16.mxu0 0
    %387 = vmatpush1.bf16.msra.mxu0 0
    %388 = vmatprep.subr.bf16.mxu0 0
    %389 = vmatpush1.bf16.msra.mxu0 0
    %390 = vmatprep.subr.bf16.mxu0 0
    %391 = vmatpush1.bf16.msra.mxu0 0
    %392 = vmatprep.subr.bf16.mxu0 0
    %393 = vmatpush1.bf16.msra.mxu0 0
    %394 = vmatprep.subr.bf16.mxu0 0
    %395 = vmatpush1.bf16.msra.mxu0 0
    %396 = vmatprep.subr.bf16.mxu0 0
    %397 = vmatpush1.bf16.msra.mxu0 0
    %398 = vmatprep.subr.bf16.mxu0 0
    %399 = vmatpush1.bf16.msra.mxu0 0
    %400 = vmatprep.subr.bf16.mxu0 0
    %401 = vmatpush1.bf16.msra.mxu0 0
    %402 = vmatprep.subr.bf16.mxu0 0
    %403 = vmatpush1.bf16.msra.mxu0 0
    %404 = vmatprep.subr.bf16.mxu0 0
    %405 = vmatpush1.bf16.msra.mxu0 0
    %406 = vmatprep.subr.bf16.mxu0 0
    %407 = vmatpush1.bf16.msra.mxu0 0
    %408 = vmatprep.subr.bf16.mxu0 0
    %409 = vmatpush1.bf16.msra.mxu0 0
    %410 = vmatprep.subr.bf16.mxu0 0
    %411 = vmatpush1.bf16.msra.mxu0 0
    %412 = vmatprep.mubr.bf16.mxu0 0
    %413 = vmatmul.mubr.bf16.gmra.mrb[0].mxu0 %v281
    %v414 = vpop.f32.mrb[0].mxu0
    %v415 = vadd.f32 %v102, %v414
    %v416 = vpop.f32.mrb[0].mxu0
    %v417 = vpop.f32.mrb[0].mxu0
    %v418 = vadd.f32 %v102, %v417
    %v419 = vpop.f32.mrb[0].mxu0
    %420 = vmatprep.mubr.bf16.mxu0 0
    %421 = vmatmul.mubr.bf16.gmra.mrb[0].mxu0 %v284
    %v422 = vpop.f32.mrb[0].mxu0
    %v423 = vadd.f32 %v102, %v422
    %v424 = vpop.f32.mrb[0].mxu0
    %v425 = vpop.f32.mrb[0].mxu0
    %v426 = vadd.f32 %v102, %v425
    %v427 = vpop.f32.mrb[0].mxu0
    %428 = vmatprep.mubr.bf16.mxu0 0
    %429 = vmatmul.mubr.bf16.gmra.mrb[0].mxu0 %v287
    %v430 = vpop.f32.mrb[0].mxu0
    %v431 = vadd.f32 %v102, %v430
    %v432 = vpop.f32.mrb[0].mxu0
    %v433 = vpop.f32.mrb[0].mxu0
    %v434 = vadd.f32 %v102, %v433
    %v435 = vpop.f32.mrb[0].mxu0
    %436 = vmatprep.mubr.bf16.mxu0 0
    %437 = vmatmul.mubr.bf16.gmra.mrb[0].mxu0 %v290
    %v438 = vpop.f32.mrb[0].mxu0
    %v439 = vadd.f32 %v102, %v438
    %v440 = vpop.f32.mrb[0].mxu0
    %v441 = vpop.f32.mrb[0].mxu0
    %v442 = vadd.f32 %v102, %v441
    %v443 = vpop.f32.mrb[0].mxu0
    %444 = vmatprep.mubr.bf16.mxu0 0
    %445 = vmatmul.mubr.bf16.gmra.mrb[0].mxu0 %v293
    %v446 = vpop.f32.mrb[0].mxu0
    %v447 = vadd.f32 %v102, %v446
    %v448 = vpop.f32.mrb[0].mxu0
    %v449 = vpop.f32.mrb[0].mxu0
    %v450 = vadd.f32 %v102, %v449
    %v451 = vpop.f32.mrb[0].mxu0
    %452 = vmatprep.mubr.bf16.mxu0 0
    %453 = vmatmul.mubr.bf16.gmra.mrb[0].mxu0 %v296
    %v454 = vpop.f32.mrb[0].mxu0
    %v455 = vadd.f32 %v102, %v454
    %v456 = vpop.f32.mrb[0].mxu0
    %v457 = vpop.f32.mrb[0].mxu0
    %v458 = vadd.f32 %v102, %v457
    %v459 = vpop.f32.mrb[0].mxu0
    %460 = vmatprep.mubr.bf16.mxu0 0
    %461 = vmatmul.mubr.bf16.gmra.mrb[0].mxu0 %v299
    %v462 = vpop.f32.mrb[0].mxu0
    %v463 = vadd.f32 %v102, %v462
    %v464 = vpop.f32.mrb[0].mxu0
    %v465 = vpop.f32.mrb[0].mxu0
    %v466 = vadd.f32 %v102, %v465
    %v467 = vpop.f32.mrb[0].mxu0
    %468 = vmatprep.mubr.bf16.mxu0 0
    %469 = vmatmul.mubr.bf16.gmra.mrb[0].mxu0 %v302
    %v470 = vpop.f32.mrb[0].mxu0
    %v471 = vadd.f32 %v102, %v470
    %v472 = vpop.f32.mrb[0].mxu0
    %v473 = vpop.f32.mrb[0].mxu0
    %v474 = vadd.f32 %v102, %v473
    %v475 = vpop.f32.mrb[0].mxu0
    %476 = vmatprep.mubr.bf16.mxu0 0
    %477 = vmatmul.mubr.bf16.gmra.mrb[0].mxu0 %v305
    %v478 = vpop.f32.mrb[0].mxu0
    %v479 = vadd.f32 %v102, %v478
    %v480 = vpop.f32.mrb[0].mxu0
    %v481 = vpop.f32.mrb[0].mxu0
    %v482 = vadd.f32 %v102, %v481
    %v483 = vpop.f32.mrb[0].mxu0
    %484 = vmatprep.mubr.bf16.mxu0 0
    %485 = vmatmul.mubr.bf16.gmra.mrb[0].mxu0 %v308
    %v486 = vpop.f32.mrb[0].mxu0
    %v487 = vadd.f32 %v102, %v486
    %v488 = vpop.f32.mrb[0].mxu0
    %v489 = vpop.f32.mrb[0].mxu0
    %v490 = vadd.f32 %v102, %v489
    %v491 = vpop.f32.mrb[0].mxu0
    %492 = vmatprep.mubr.bf16.mxu0 0
    %493 = vmatmul.mubr.bf16.gmra.mrb[0].mxu0 %v311
    %v494 = vpop.f32.mrb[0].mxu0
    %v495 = vadd.f32 %v102, %v494
    %v496 = vpop.f32.mrb[0].mxu0
    %v497 = vpop.f32.mrb[0].mxu0
    %v498 = vadd.f32 %v102, %v497
    %v499 = vpop.f32.mrb[0].mxu0
    %500 = vmatprep.mubr.bf16.mxu0 0
    %501 = vmatmul.mubr.bf16.gmra.mrb[0].mxu0 %v314
    %v502 = vpop.f32.mrb[0].mxu0
    %v503 = vadd.f32 %v102, %v502
    %v504 = vpop.f32.mrb[0].mxu0
    %v505 = vpop.f32.mrb[0].mxu0
    %v506 = vadd.f32 %v102, %v505
    %v507 = vpop.f32.mrb[0].mxu0
    %508 = vmatprep.mubr.bf16.mxu0 0
    %509 = vmatmul.mubr.bf16.gmra.mrb[0].mxu0 %v317
    %v510 = vpop.f32.mrb[0].mxu0
    %v511 = vadd.f32 %v102, %v510
    %v512 = vpop.f32.mrb[0].mxu0
    %v513 = vpop.f32.mrb[0].mxu0
    %v514 = vadd.f32 %v102, %v513
    %v515 = vpop.f32.mrb[0].mxu0
    %516 = vmatprep.mubr.bf16.mxu0 0
    %517 = vmatmul.mubr.bf16.gmra.mrb[0].mxu0 %v320
    %v518 = vpop.f32.mrb[0].mxu0
    %v519 = vadd.f32 %v102, %v518
    %v520 = vpop.f32.mrb[0].mxu0
    %v521 = vpop.f32.mrb[0].mxu0
    %v522 = vadd.f32 %v102, %v521
    %v523 = vpop.f32.mrb[0].mxu0
    %524 = vmatprep.mubr.bf16.mxu0 0
    %525 = vmatmul.mubr.bf16.gmra.mrb[0].mxu0 %v323
    %v526 = vpop.f32.mrb[0].mxu0
    %v527 = vadd.f32 %v102, %v526
    %v528 = vpop.f32.mrb[0].mxu0
    %v529 = vpop.f32.mrb[0].mxu0
    %v530 = vadd.f32 %v102, %v529
    %v531 = vpop.f32.mrb[0].mxu0
    %532 = vmatprep.mubr.bf16.mxu0 0
    %533 = vmatmul.mubr.bf16.gmra.mrb[0].mxu0 %v326
    %v534 = vpop.f32.mrb[0].mxu0
    %v535 = vadd.f32 %v102, %v534
    %v536 = vpop.f32.mrb[0].mxu0
    %v537 = vpop.f32.mrb[0].mxu0
    %v538 = vadd.f32 %v102, %v537
    %v539 = vpop.f32.mrb[0].mxu0
    %540 = vmatprep.mubr.bf16.mxu0 0
    %541 = vmatmul.mubr.bf16.gmra.mrb[0].mxu0 %v329
    %v542 = vpop.f32.mrb[0].mxu0
    %v543 = vadd.f32 %v102, %v542
    %v544 = vpop.f32.mrb[0].mxu0
    %v545 = vpop.f32.mrb[0].mxu0
    %v546 = vadd.f32 %v102, %v545
    %v547 = vpop.f32.mrb[0].mxu0
    %548 = vmatprep.mubr.bf16.mxu0 0
    %549 = vmatmul.mubr.bf16.gmra.mrb[0].mxu0 %v332
    %v550 = vpop.f32.mrb[0].mxu0
    %v551 = vadd.f32 %v102, %v550
    %v552 = vpop.f32.mrb[0].mxu0
    %v553 = vpop.f32.mrb[0].mxu0
    %v554 = vadd.f32 %v102, %v553
    %v555 = vpop.f32.mrb[0].mxu0
    %556 = vmatprep.mubr.bf16.mxu0 0
    %557 = vmatmul.mubr.bf16.gmra.mrb[0].mxu0 %v335
    %v558 = vpop.f32.mrb[0].mxu0
    %v559 = vadd.f32 %v102, %v558
    %v560 = vpop.f32.mrb[0].mxu0
    %v561 = vpop.f32.mrb[0].mxu0
    %v562 = vadd.f32 %v102, %v561
    %v563 = vpop.f32.mrb[0].mxu0
    %564 = vmatprep.mubr.bf16.mxu0 0
    %565 = vmatmul.mubr.bf16.gmra.mrb[0].mxu0 %v338
    %v566 = vpop.f32.mrb[0].mxu0
    %v567 = vadd.f32 %v102, %v566
    %v568 = vpop.f32.mrb[0].mxu0
    %v569 = vpop.f32.mrb[0].mxu0
    %v570 = vadd.f32 %v102, %v569
    %v571 = vpop.f32.mrb[0].mxu0
    %572 = vmatprep.mubr.bf16.mxu0 0
    %573 = vmatmul.mubr.bf16.gmra.mrb[0].mxu0 %v341
    %v574 = vpop.f32.mrb[0].mxu0
    %v575 = vadd.f32 %v102, %v574
    %v576 = vpop.f32.mrb[0].mxu0
    %v577 = vpop.f32.mrb[0].mxu0
    %v578 = vadd.f32 %v102, %v577
    %v579 = vpop.f32.mrb[0].mxu0
    %580 = vmatprep.mubr.bf16.mxu0 0
    %581 = vmatmul.mubr.bf16.gmra.mrb[0].mxu0 %v344
    %v582 = vpop.f32.mrb[0].mxu0
    %v583 = vadd.f32 %v102, %v582
    %v584 = vpop.f32.mrb[0].mxu0
    %v585 = vpop.f32.mrb[0].mxu0
    %v586 = vadd.f32 %v102, %v585
    %v587 = vpop.f32.mrb[0].mxu0
    %588 = vmatprep.mubr.bf16.mxu0 0
    %589 = vmatmul.mubr.bf16.gmra.mrb[0].mxu0 %v347
    %v590 = vpop.f32.mrb[0].mxu0
    %v591 = vadd.f32 %v102, %v590
    %v592 = vpop.f32.mrb[0].mxu0
    %v593 = vpop.f32.mrb[0].mxu0
    %v594 = vadd.f32 %v102, %v593
    %v595 = vpop.f32.mrb[0].mxu0
    %596 = vmatprep.mubr.bf16.mxu0 0
    %597 = vmatmul.mubr.bf16.gmra.mrb[0].mxu0 %v350
    %v598 = vpop.f32.mrb[0].mxu0
    %v599 = vadd.f32 %v102, %v598
    %v600 = vpop.f32.mrb[0].mxu0
    %v601 = vpop.f32.mrb[0].mxu0
    %v602 = vadd.f32 %v102, %v601
    %v603 = vpop.f32.mrb[0].mxu0
    %604 = vmatprep.mubr.bf16.mxu0 0
    %605 = vmatmul.mubr.bf16.gmra.mrb[0].mxu0 %v353
    %v606 = vpop.f32.mrb[0].mxu0
    %v607 = vadd.f32 %v102, %v606
    %v608 = vpop.f32.mrb[0].mxu0
    %v609 = vpop.f32.mrb[0].mxu0
    %v610 = vadd.f32 %v102, %v609
    %v611 = vpop.f32.mrb[0].mxu0
    %612 = vmatprep.mubr.bf16.mxu0 0
    %613 = vmatmul.mubr.bf16.gmra.mrb[0].mxu0 %v356
    %v614 = vpop.f32.mrb[0].mxu0
    %v615 = vadd.f32 %v102, %v614
    %v616 = vpop.f32.mrb[0].mxu0
    %v617 = vpop.f32.mrb[0].mxu0
    %v618 = vadd.f32 %v102, %v617
    %v619 = vpop.f32.mrb[0].mxu0
    %620 = vmatprep.mubr.bf16.mxu0 0
    %621 = vmatmul.mubr.bf16.gmra.mrb[0].mxu0 %v359
    %v622 = vpop.f32.mrb[0].mxu0
    %v623 = vadd.f32 %v102, %v622
    %v624 = vpop.f32.mrb[0].mxu0
    %v625 = vpop.f32.mrb[0].mxu0
    %v626 = vadd.f32 %v102, %v625
    %v627 = vpop.f32.mrb[0].mxu0
    %628 = vmatprep.mubr.bf16.mxu0 0
    %629 = vmatmul.mubr.bf16.gmra.mrb[0].mxu0 %v362
    %v630 = vpop.f32.mrb[0].mxu0
    %v631 = vadd.f32 %v102, %v630
    %v632 = vpop.f32.mrb[0].mxu0
    %v633 = vpop.f32.mrb[0].mxu0
    %v634 = vadd.f32 %v102, %v633
    %v635 = vpop.f32.mrb[0].mxu0
    %636 = vmatprep.mubr.bf16.mxu0 0
    %637 = vmatmul.mubr.bf16.gmra.mrb[0].mxu0 %v365
    %v638 = vpop.f32.mrb[0].mxu0
    %v639 = vadd.f32 %v102, %v638
    %v640 = vpop.f32.mrb[0].mxu0
    %v641 = vpop.f32.mrb[0].mxu0
    %v642 = vadd.f32 %v102, %v641
    %v643 = vpop.f32.mrb[0].mxu0
    %644 = vmatprep.mubr.bf16.mxu0 0
    %645 = vmatmul.mubr.bf16.gmra.mrb[0].mxu0 %v368
    %v646 = vpop.f32.mrb[0].mxu0
    %v647 = vadd.f32 %v102, %v646
    %v648 = vpop.f32.mrb[0].mxu0
    %v649 = vpop.f32.mrb[0].mxu0
    %v650 = vadd.f32 %v102, %v649
    %v651 = vpop.f32.mrb[0].mxu0
    %652 = vmatprep.mubr.bf16.mxu0 0
    %653 = vmatmul.mubr.bf16.gmra.mrb[0].mxu0 %v371
    %v654 = vpop.f32.mrb[0].mxu0
    %v655 = vadd.f32 %v102, %v654
    %v656 = vpop.f32.mrb[0].mxu0
    %v657 = vpop.f32.mrb[0].mxu0
    %v658 = vadd.f32 %v102, %v657
    %v659 = vpop.f32.mrb[0].mxu0
    %660 = vmatprep.mubr.bf16.mxu0 0
    %661 = vmatmul.mubr.bf16.gmra.mrb[0].mxu0 %v374
    %v662 = vpop.f32.mrb[0].mxu0
    %v663 = vadd.f32 %v102, %v662
    %v664 = vpop.f32.mrb[0].mxu0
    %v665 = vpop.f32.mrb[0].mxu0
    %v666 = vadd.f32 %v102, %v665
    %v667 = vpop.f32.mrb[0].mxu0
    %668 = vdwg.mxu0
    %v669 = vmax.f32 %v415, 0.0
    %v670 = vmax.f32 %v418, 0.0
    %v671 = vmax.f32 %v423, 0.0
    %v672 = vmax.f32 %v426, 0.0
    %v673 = vmax.f32 %v431, 0.0
    %v674 = vmax.f32 %v434, 0.0
    %v675 = vmax.f32 %v439, 0.0
    %v676 = vmax.f32 %v442, 0.0
    %v677 = vmax.f32 %v447, 0.0
    %v678 = vmax.f32 %v450, 0.0
    %v679 = vmax.f32 %v455, 0.0
    %v680 = vmax.f32 %v458, 0.0
    %v681 = vmax.f32 %v463, 0.0
    %v682 = vmax.f32 %v466, 0.0
    %v683 = vmax.f32 %v471, 0.0
    %v684 = vmax.f32 %v474, 0.0
    %v685 = vmax.f32 %v479, 0.0
    %v686 = vmax.f32 %v482, 0.0
    %v687 = vmax.f32 %v487, 0.0
    %v688 = vmax.f32 %v490, 0.0
    %v689 = vmax.f32 %v495, 0.0
    %v690 = vmax.f32 %v498, 0.0
    %v691 = vmax.f32 %v503, 0.0
    %v692 = vmax.f32 %v506, 0.0
    %v693 = vmax.f32 %v511, 0.0
    %v694 = vmax.f32 %v514, 0.0
    %v695 = vmax.f32 %v519, 0.0
    %v696 = vmax.f32 %v522, 0.0
    %v697 = vmax.f32 %v527, 0.0
    %v698 = vmax.f32 %v530, 0.0
    %v699 = vmax.f32 %v535, 0.0
    %v700 = vmax.f32 %v538, 0.0
    %v701 = vmax.f32 %v543, 0.0
    %v702 = vmax.f32 %v546, 0.0
    %v703 = vmax.f32 %v551, 0.0
    %v704 = vmax.f32 %v554, 0.0
    %v705 = vmax.f32 %v559, 0.0
    %v706 = vmax.f32 %v562, 0.0
    %v707 = vmax.f32 %v567, 0.0
    %v708 = vmax.f32 %v570, 0.0
    %v709 = vmax.f32 %v575, 0.0
    %v710 = vmax.f32 %v578, 0.0
    %v711 = vmax.f32 %v583, 0.0
    %v712 = vmax.f32 %v586, 0.0
    %v713 = vmax.f32 %v591, 0.0
    %v714 = vmax.f32 %v594, 0.0
    %v715 = vmax.f32 %v599, 0.0
    %v716 = vmax.f32 %v602, 0.0
    %v717 = vmax.f32 %v607, 0.0
    %v718 = vmax.f32 %v610, 0.0
    %v719 = vmax.f32 %v615, 0.0
    %v720 = vmax.f32 %v618, 0.0
    %v721 = vmax.f32 %v623, 0.0
    %v722 = vmax.f32 %v626, 0.0
    %v723 = vmax.f32 %v631, 0.0
    %v724 = vmax.f32 %v634, 0.0
    %v725 = vmax.f32 %v639, 0.0
    %v726 = vmax.f32 %v642, 0.0
    %v727 = vmax.f32 %v647, 0.0
    %v728 = vmax.f32 %v650, 0.0
    %v729 = vmax.f32 %v655, 0.0
    %v730 = vmax.f32 %v658, 0.0
    %v731 = vmax.f32 %v663, 0.0
    %v732 = vmax.f32 %v666, 0.0
    %v733 = vmax.f32 %v669, 1e-06
    %v734 = vmax.f32 %v670, 1e-06
    %v735 = vmax.f32 %v671, 1e-06
    %v736 = vmax.f32 %v672, 1e-06
    %v737 = vmax.f32 %v673, 1e-06
    %v738 = vmax.f32 %v674, 1e-06
    %v739 = vmax.f32 %v675, 1e-06
    %v740 = vmax.f32 %v676, 1e-06
    %v741 = vmax.f32 %v677, 1e-06
    %v742 = vmax.f32 %v678, 1e-06
    %v743 = vmax.f32 %v679, 1e-06
    %v744 = vmax.f32 %v680, 1e-06
    %v745 = vmax.f32 %v681, 1e-06
    %v746 = vmax.f32 %v682, 1e-06
    %v747 = vmax.f32 %v683, 1e-06
    %v748 = vmax.f32 %v684, 1e-06
    %v749 = vmax.f32 %v685, 1e-06
    %v750 = vmax.f32 %v686, 1e-06
    %v751 = vmax.f32 %v687, 1e-06
    %v752 = vmax.f32 %v688, 1e-06
    %v753 = vmax.f32 %v689, 1e-06
    %v754 = vmax.f32 %v690, 1e-06
    %v755 = vmax.f32 %v691, 1e-06
    %v756 = vmax.f32 %v692, 1e-06
    %v757 = vmax.f32 %v693, 1e-06
    %v758 = vmax.f32 %v694, 1e-06
    %v759 = vmax.f32 %v695, 1e-06
    %v760 = vmax.f32 %v696, 1e-06
    %v761 = vmax.f32 %v697, 1e-06
    %v762 = vmax.f32 %v698, 1e-06
    %v763 = vmax.f32 %v699, 1e-06
    %v764 = vmax.f32 %v700, 1e-06
    %v765 = vmax.f32 %v701, 1e-06
    %v766 = vmax.f32 %v702, 1e-06
    %v767 = vmax.f32 %v703, 1e-06
    %v768 = vmax.f32 %v704, 1e-06
    %v769 = vmax.f32 %v705, 1e-06
    %v770 = vmax.f32 %v706, 1e-06
    %v771 = vmax.f32 %v707, 1e-06
    %v772 = vmax.f32 %v708, 1e-06
    %v773 = vmax.f32 %v709, 1e-06
    %v774 = vmax.f32 %v710, 1e-06
    %v775 = vmax.f32 %v711, 1e-06
    %v776 = vmax.f32 %v712, 1e-06
    %v777 = vmax.f32 %v713, 1e-06
    %v778 = vmax.f32 %v714, 1e-06
    %v779 = vmax.f32 %v715, 1e-06
    %v780 = vmax.f32 %v716, 1e-06
    %v781 = vmax.f32 %v717, 1e-06
    %v782 = vmax.f32 %v718, 1e-06
    %v783 = vmax.f32 %v719, 1e-06
    %v784 = vmax.f32 %v720, 1e-06
    %v785 = vmax.f32 %v721, 1e-06
    %v786 = vmax.f32 %v722, 1e-06
    %v787 = vmax.f32 %v723, 1e-06
    %v788 = vmax.f32 %v724, 1e-06
    %v789 = vmax.f32 %v725, 1e-06
    %v790 = vmax.f32 %v726, 1e-06
    %v791 = vmax.f32 %v727, 1e-06
    %v792 = vmax.f32 %v728, 1e-06
    %v793 = vmax.f32 %v729, 1e-06
    %v794 = vmax.f32 %v730, 1e-06
    %v795 = vmax.f32 %v731, 1e-06
    %v796 = vmax.f32 %v732, 1e-06
    %v797 = vmul.f32 %v733, %v733
    %v798 = vmul.f32 %v734, %v734
    %v799 = vmul.f32 %v735, %v735
    %v800 = vmul.f32 %v736, %v736
    %v801 = vmul.f32 %v737, %v737
    %v802 = vmul.f32 %v738, %v738
    %v803 = vmul.f32 %v739, %v739
    %v804 = vmul.f32 %v740, %v740
    %v805 = vmul.f32 %v741, %v741
    %v806 = vmul.f32 %v742, %v742
    %v807 = vmul.f32 %v743, %v743
    %v808 = vmul.f32 %v744, %v744
    %v809 = vmul.f32 %v745, %v745
    %v810 = vmul.f32 %v746, %v746
    %v811 = vmul.f32 %v747, %v747
    %v812 = vmul.f32 %v748, %v748
    %v813 = vmul.f32 %v749, %v749
    %v814 = vmul.f32 %v750, %v750
    %v815 = vmul.f32 %v751, %v751
    %v816 = vmul.f32 %v752, %v752
    %v817 = vmul.f32 %v753, %v753
    %v818 = vmul.f32 %v754, %v754
    %v819 = vmul.f32 %v755, %v755
    %v820 = vmul.f32 %v756, %v756
    %v821 = vmul.f32 %v757, %v757
    %v822 = vmul.f32 %v758, %v758
    %v823 = vmul.f32 %v759, %v759
    %v824 = vmul.f32 %v760, %v760
    %v825 = vmul.f32 %v761, %v761
    %v826 = vmul.f32 %v762, %v762
    %v827 = vmul.f32 %v763, %v763
    %v828 = vmul.f32 %v764, %v764
    %v829 = vmul.f32 %v765, %v765
    %v830 = vmul.f32 %v766, %v766
    %v831 = vmul.f32 %v767, %v767
    %v832 = vmul.f32 %v768, %v768
    %v833 = vmul.f32 %v769, %v769
    %v834 = vmul.f32 %v770, %v770
    %v835 = vmul.f32 %v771, %v771
    %v836 = vmul.f32 %v772, %v772
    %v837 = vmul.f32 %v773, %v773
    %v838 = vmul.f32 %v774, %v774
    %v839 = vmul.f32 %v775, %v775
    %v840 = vmul.f32 %v776, %v776
    %v841 = vmul.f32 %v777, %v777
    %v842 = vmul.f32 %v778, %v778
    %v843 = vmul.f32 %v779, %v779
    %v844 = vmul.f32 %v780, %v780
    %v845 = vmul.f32 %v781, %v781
    %v846 = vmul.f32 %v782, %v782
    %v847 = vmul.f32 %v783, %v783
    %v848 = vmul.f32 %v784, %v784
    %v849 = vmul.f32 %v785, %v785
    %v850 = vmul.f32 %v786, %v786
    %v851 = vmul.f32 %v787, %v787
    %v852 = vmul.f32 %v788, %v788
    %v853 = vmul.f32 %v789, %v789
    %v854 = vmul.f32 %v790, %v790
    %v855 = vmul.f32 %v791, %v791
    %v856 = vmul.f32 %v792, %v792
    %v857 = vmul.f32 %v793, %v793
    %v858 = vmul.f32 %v794, %v794
    %v859 = vmul.f32 %v795, %v795
    %v860 = vmul.f32 %v796, %v796
    %v861 = vmul.f32 %v797, %v733
    %v862 = vmul.f32 %v798, %v734
    %v863 = vmul.f32 %v799, %v735
    %v864 = vmul.f32 %v800, %v736
    %v865 = vmul.f32 %v801, %v737
    %v866 = vmul.f32 %v802, %v738
    %v867 = vmul.f32 %v803, %v739
    %v868 = vmul.f32 %v804, %v740
    %v869 = vmul.f32 %v805, %v741
    %v870 = vmul.f32 %v806, %v742
    %v871 = vmul.f32 %v807, %v743
    %v872 = vmul.f32 %v808, %v744
    %v873 = vmul.f32 %v809, %v745
    %v874 = vmul.f32 %v810, %v746
    %v875 = vmul.f32 %v811, %v747
    %v876 = vmul.f32 %v812, %v748
    %v877 = vmul.f32 %v813, %v749
    %v878 = vmul.f32 %v814, %v750
    %v879 = vmul.f32 %v815, %v751
    %v880 = vmul.f32 %v816, %v752
    %v881 = vmul.f32 %v817, %v753
    %v882 = vmul.f32 %v818, %v754
    %v883 = vmul.f32 %v819, %v755
    %v884 = vmul.f32 %v820, %v756
    %v885 = vmul.f32 %v821, %v757
    %v886 = vmul.f32 %v822, %v758
    %v887 = vmul.f32 %v823, %v759
    %v888 = vmul.f32 %v824, %v760
    %v889 = vmul.f32 %v825, %v761
    %v890 = vmul.f32 %v826, %v762
    %v891 = vmul.f32 %v827, %v763
    %v892 = vmul.f32 %v828, %v764
    %v893 = vmul.f32 %v829, %v765
    %v894 = vmul.f32 %v830, %v766
    %v895 = vmul.f32 %v831, %v767
    %v896 = vmul.f32 %v832, %v768
    %v897 = vmul.f32 %v833, %v769
    %v898 = vmul.f32 %v834, %v770
    %v899 = vmul.f32 %v835, %v771
    %v900 = vmul.f32 %v836, %v772
    %v901 = vmul.f32 %v837, %v773
    %v902 = vmul.f32 %v838, %v774
    %v903 = vmul.f32 %v839, %v775
    %v904 = vmul.f32 %v840, %v776
    %v905 = vmul.f32 %v841, %v777
    %v906 = vmul.f32 %v842, %v778
    %v907 = vmul.f32 %v843, %v779
    %v908 = vmul.f32 %v844, %v780
    %v909 = vmul.f32 %v845, %v781
    %v910 = vmul.f32 %v846, %v782
    %v911 = vmul.f32 %v847, %v783
    %v912 = vmul.f32 %v848, %v784
    %v913 = vmul.f32 %v849, %v785
    %v914 = vmul.f32 %v850, %v786
    %v915 = vmul.f32 %v851, %v787
    %v916 = vmul.f32 %v852, %v788
    %v917 = vmul.f32 %v853, %v789
    %v918 = vmul.f32 %v854, %v790
    %v919 = vmul.f32 %v855, %v791
    %v920 = vmul.f32 %v856, %v792
    %v921 = vmul.f32 %v857, %v793
    %v922 = vmul.f32 %v858, %v794
    %v923 = vmul.f32 %v859, %v795
    %v924 = vmul.f32 %v860, %v796
    %v925 = vld [vmem:[%s3] sm:$0xff]
    %v927 = vcombine.high %v925, %v925
    %v929 = vunpack.c.l.s4 1983009808
    %v930 = vunpack.c.0.s8 %v929
    %v931 = vlaneseq
    %v932 = vshrl.u32 %v931, 7
    %v933 = vsub.s32 %v930, %v932
    %v934 = vrot.slane %v925, %v933
    %v936 = vunpack.c.l.s4 1983009808
    %v937 = vunpack.c.0.s8 %v936
    %v938 = vlaneseq
    %v939 = vshrl.u32 %v938, 7
    %v940 = vsub.s32 %v937, %v939
    %v941 = vrot.slane %v927, %v940
    %v942 = vcombine.high %v934, %v934
    %v943 = vcombine.high %v941, %v941
    %948 = vmatprep.subr.mxu0 0.0
    %949 = vmatpush1.msra.mxu0 %v861
    %950 = vmatprep.subr.mxu0 0.0
    %951 = vmatpush1.msra.mxu0 %v862
    %952 = vmatprep.subr.mxu0 0.0
    %953 = vmatpush1.msra.mxu0 %v863
    %954 = vmatprep.subr.mxu0 0.0
    %955 = vmatpush1.msra.mxu0 %v864
    %956 = vmatprep.subr.mxu0 0.0
    %957 = vmatpush1.msra.mxu0 %v865
    %958 = vmatprep.subr.mxu0 0.0
    %959 = vmatpush1.msra.mxu0 %v866
    %960 = vmatprep.subr.mxu0 0.0
    %961 = vmatpush1.msra.mxu0 %v867
    %962 = vmatprep.subr.mxu0 0.0
    %963 = vmatpush1.msra.mxu0 %v868
    %964 = vmatprep.subr.mxu0 0.0
    %965 = vmatpush1.msra.mxu0 %v869
    %966 = vmatprep.subr.mxu0 0.0
    %967 = vmatpush1.msra.mxu0 %v870
    %968 = vmatprep.subr.mxu0 0.0
    %969 = vmatpush1.msra.mxu0 %v871
    %970 = vmatprep.subr.mxu0 0.0
    %971 = vmatpush1.msra.mxu0 %v872
    %972 = vmatprep.subr.mxu0 0.0
    %973 = vmatpush1.msra.mxu0 %v873
    %974 = vmatprep.subr.mxu0 0.0
    %975 = vmatpush1.msra.mxu0 %v874
    %976 = vmatprep.subr.mxu0 0.0
    %977 = vmatpush1.msra.mxu0 %v875
    %978 = vmatprep.subr.mxu0 0.0
    %979 = vmatpush1.msra.mxu0 %v876
    %980 = vmatprep.subr.mxu0 0.0
    %981 = vmatpush1.msra.mxu0 %v877
    %982 = vmatprep.subr.mxu0 0.0
    %983 = vmatpush1.msra.mxu0 %v878
    %984 = vmatprep.subr.mxu0 0.0
    %985 = vmatpush1.msra.mxu0 %v879
    %986 = vmatprep.subr.mxu0 0.0
    %987 = vmatpush1.msra.mxu0 %v880
    %988 = vmatprep.subr.mxu0 0.0
    %989 = vmatpush1.msra.mxu0 %v881
    %990 = vmatprep.subr.mxu0 0.0
    %991 = vmatpush1.msra.mxu0 %v882
    %992 = vmatprep.subr.mxu0 0.0
    %993 = vmatpush1.msra.mxu0 %v883
    %994 = vmatprep.subr.mxu0 0.0
    %995 = vmatpush1.msra.mxu0 %v884
    %996 = vmatprep.subr.mxu0 0.0
    %997 = vmatpush1.msra.mxu0 %v885
    %998 = vmatprep.subr.mxu0 0.0
    %999 = vmatpush1.msra.mxu0 %v886
    %1000 = vmatprep.subr.mxu0 0.0
    %1001 = vmatpush1.msra.mxu0 %v887
    %1002 = vmatprep.subr.mxu0 0.0
    %1003 = vmatpush1.msra.mxu0 %v888
    %1004 = vmatprep.subr.mxu0 0.0
    %1005 = vmatpush1.msra.mxu0 %v889
    %1006 = vmatprep.subr.mxu0 0.0
    %1007 = vmatpush1.msra.mxu0 %v890
    %1008 = vmatprep.subr.mxu0 0.0
    %1009 = vmatpush1.msra.mxu0 %v891
    %1010 = vmatprep.subr.mxu0 0.0
    %1011 = vmatpush1.msra.mxu0 %v892
    %1012 = vmatprep.mubr.f32.mxu0 %v942
    %1013 = vmatmul.mubr.f32.gmra.mrb[0].mxu0 %v934
    %v1014 = vpop.f32.mrb[0].mxu0
    %v1015 = vadd.f32 0.0, %v1014
    %v1016 = vpop.f32.mrb[0].mxu0
    %1017 = vdwg.mxu0
    %1018 = vmatprep.subr.mxu0 0.0
    %1019 = vmatpush1.msra.mxu0 %v893
    %1020 = vmatprep.subr.mxu0 0.0
    %1021 = vmatpush1.msra.mxu0 %v894
    %1022 = vmatprep.subr.mxu0 0.0
    %1023 = vmatpush1.msra.mxu0 %v895
    %1024 = vmatprep.subr.mxu0 0.0
    %1025 = vmatpush1.msra.mxu0 %v896
    %1026 = vmatprep.subr.mxu0 0.0
    %1027 = vmatpush1.msra.mxu0 %v897
    %1028 = vmatprep.subr.mxu0 0.0
    %1029 = vmatpush1.msra.mxu0 %v898
    %1030 = vmatprep.subr.mxu0 0.0
    %1031 = vmatpush1.msra.mxu0 %v899
    %1032 = vmatprep.subr.mxu0 0.0
    %1033 = vmatpush1.msra.mxu0 %v900
    %1034 = vmatprep.subr.mxu0 0.0
    %1035 = vmatpush1.msra.mxu0 %v901
    %1036 = vmatprep.subr.mxu0 0.0
    %1037 = vmatpush1.msra.mxu0 %v902
    %1038 = vmatprep.subr.mxu0 0.0
    %1039 = vmatpush1.msra.mxu0 %v903
    %1040 = vmatprep.subr.mxu0 0.0
    %1041 = vmatpush1.msra.mxu0 %v904
    %1042 = vmatprep.subr.mxu0 0.0
    %1043 = vmatpush1.msra.mxu0 %v905
    %1044 = vmatprep.subr.mxu0 0.0
    %1045 = vmatpush1.msra.mxu0 %v906
    %1046 = vmatprep.subr.mxu0 0.0
    %1047 = vmatpush1.msra.mxu0 %v907
    %1048 = vmatprep.subr.mxu0 0.0
    %1049 = vmatpush1.msra.mxu0 %v908
    %1050 = vmatprep.subr.mxu0 0.0
    %1051 = vmatpush1.msra.mxu0 %v909
    %1052 = vmatprep.subr.mxu0 0.0
    %1053 = vmatpush1.msra.mxu0 %v910
    %1054 = vmatprep.subr.mxu0 0.0
    %1055 = vmatpush1.msra.mxu0 %v911
    %1056 = vmatprep.subr.mxu0 0.0
    %1057 = vmatpush1.msra.mxu0 %v912
    %1058 = vmatprep.subr.mxu0 0.0
    %1059 = vmatpush1.msra.mxu0 %v913
    %1060 = vmatprep.subr.mxu0 0.0
    %1061 = vmatpush1.msra.mxu0 %v914
    %1062 = vmatprep.subr.mxu0 0.0
    %1063 = vmatpush1.msra.mxu0 %v915
    %1064 = vmatprep.subr.mxu0 0.0
    %1065 = vmatpush1.msra.mxu0 %v916
    %1066 = vmatprep.subr.mxu0 0.0
    %1067 = vmatpush1.msra.mxu0 %v917
    %1068 = vmatprep.subr.mxu0 0.0
    %1069 = vmatpush1.msra.mxu0 %v918
    %1070 = vmatprep.subr.mxu0 0.0
    %1071 = vmatpush1.msra.mxu0 %v919
    %1072 = vmatprep.subr.mxu0 0.0
    %1073 = vmatpush1.msra.mxu0 %v920
    %1074 = vmatprep.subr.mxu0 0.0
    %1075 = vmatpush1.msra.mxu0 %v921
    %1076 = vmatprep.subr.mxu0 0.0
    %1077 = vmatpush1.msra.mxu0 %v922
    %1078 = vmatprep.subr.mxu0 0.0
    %1079 = vmatpush1.msra.mxu0 %v923
    %1080 = vmatprep.subr.mxu0 0.0
    %1081 = vmatpush1.msra.mxu0 %v924
    %1082 = vmatprep.mubr.f32.mxu0 %v943
    %1083 = vmatmul.mubr.f32.gmra.mrb[0].mxu0 %v941
    %v1084 = vpop.f32.mrb[0].mxu0
    %v1085 = vadd.f32 %v1015, %v1084
    %v1086 = vpop.f32.mrb[0].mxu0
    %1087 = vdwg.mxu0
    %v1088 = vlog2.pop %v1085
    %v1089 = vmul.f32 %v1088, 0.6931472
    %v1090 = vmul.f32 %v1089, 0.33333334
    %v1091 = vmul.f32 %v1090, 1.442695
    %v1092 = vpow.pop %v1091
    %v1093 = vld [vmem:[%s4] sm:$0xff]
    %v1094 = vld [vmem:[%s4 + $0x8] sm:$0xff]
    %v1095 = vld [vmem:[%s4 + $0x10] sm:$0xff]
    %v1096 = vld [vmem:[%s4 + $0x18] sm:$0xff]
    %v1097 = vld [vmem:[%s5] sm:$0x1]
    %v1099 = vlaneseq
    %v1100 = vshrl.u32 %v1099, 7
    %v1101 = vsub.s32 0, %v1100
    %v1102 = vrot.slane %v1097, %v1101
    %vm1104 = vcmask 261120
    %v1106 = vsel %vm1104, %v1092, 0
    %1108 = vmatprep.subr.mxu0 0.0
    %1109 = vmatpush1.msra.mxu0 %v1093
    %1110 = vmatprep.subr.mxu0 0.0
    %1111 = vmatpush1.msra.mxu0 %v1094
    %1112 = vmatprep.subr.mxu0 0.0
    %1113 = vmatpush1.msra.mxu0 %v1095
    %1114 = vmatprep.subr.mxu0 0.0
    %1115 = vmatpush1.msra.mxu0 %v1096
    %1116 = vmatprep.subr.mxu0 0.0
    %1117 = vmatpush1.msra.mxu0 0.0
    %1118 = vmatprep.subr.mxu0 0.0
    %1119 = vmatpush1.msra.mxu0 0.0
    %1120 = vmatprep.subr.mxu0 0.0
    %1121 = vmatpush1.msra.mxu0 0.0
    %1122 = vmatprep.subr.mxu0 0.0
    %1123 = vmatpush1.msra.mxu0 0.0
    %1124 = vmatprep.subr.mxu0 0.0
    %1125 = vmatpush1.msra.mxu0 0.0
    %1126 = vmatprep.subr.mxu0 0.0
    %1127 = vmatpush1.msra.mxu0 0.0
    %1128 = vmatprep.subr.mxu0 0.0
    %1129 = vmatpush1.msra.mxu0 0.0
    %1130 = vmatprep.subr.mxu0 0.0
    %1131 = vmatpush1.msra.mxu0 0.0
    %1132 = vmatprep.subr.mxu0 0.0
    %1133 = vmatpush1.msra.mxu0 0.0
    %1134 = vmatprep.subr.mxu0 0.0
    %1135 = vmatpush1.msra.mxu0 0.0
    %1136 = vmatprep.subr.mxu0 0.0
    %1137 = vmatpush1.msra.mxu0 0.0
    %1138 = vmatprep.subr.mxu0 0.0
    %1139 = vmatpush1.msra.mxu0 0.0
    %1140 = vmatprep.subr.mxu0 0.0
    %1141 = vmatpush1.msra.mxu0 0.0
    %1142 = vmatprep.subr.mxu0 0.0
    %1143 = vmatpush1.msra.mxu0 0.0
    %1144 = vmatprep.subr.mxu0 0.0
    %1145 = vmatpush1.msra.mxu0 0.0
    %1146 = vmatprep.subr.mxu0 0.0
    %1147 = vmatpush1.msra.mxu0 0.0
    %1148 = vmatprep.subr.mxu0 0.0
    %1149 = vmatpush1.msra.mxu0 0.0
    %1150 = vmatprep.subr.mxu0 0.0
    %1151 = vmatpush1.msra.mxu0 0.0
    %1152 = vmatprep.subr.mxu0 0.0
    %1153 = vmatpush1.msra.mxu0 0.0
    %1154 = vmatprep.subr.mxu0 0.0
    %1155 = vmatpush1.msra.mxu0 0.0
    %1156 = vmatprep.subr.mxu0 0.0
    %1157 = vmatpush1.msra.mxu0 0.0
    %1158 = vmatprep.subr.mxu0 0.0
    %1159 = vmatpush1.msra.mxu0 0.0
    %1160 = vmatprep.subr.mxu0 0.0
    %1161 = vmatpush1.msra.mxu0 0.0
    %1162 = vmatprep.subr.mxu0 0.0
    %1163 = vmatpush1.msra.mxu0 0.0
    %1164 = vmatprep.subr.mxu0 0.0
    %1165 = vmatpush1.msra.mxu0 0.0
    %1166 = vmatprep.subr.mxu0 0.0
    %1167 = vmatpush1.msra.mxu0 0.0
    %1168 = vmatprep.subr.mxu0 0.0
    %1169 = vmatpush1.msra.mxu0 0.0
    %1170 = vmatprep.subr.mxu0 0.0
    %1171 = vmatpush1.msra.mxu0 0.0
    %1172 = vmatprep.mubr.f32.mxu0 0.0
    %1173 = vmatmul.mubr.f32.gmra.mrb[0].mxu0 %v1106
    %v1174 = vpop.f32.mrb[0].mxu0
    %v1175 = vadd.f32 %v1102, %v1174
    %v1176 = vpop.f32.mrb[0].mxu0
    %1177 = vdwg.mxu0
    %vm1178 = vcmp.gt.f32.partialorder %v1175, 0.0
    %v1179 = vmul.f32 %v1175, 0.25
    %v1180 = vsel %vm1178, %v1175, %v1179
    %v1181 = vmul.f32 %v1180, %v1180
    %vm1182 = vcmask 254976
    %v1183 = vsel %vm1182, %v1181, 0.0
    %1184 = vadd.xlane.f32.xlu0 %v1183
    %v1185 = vpop.xlane.xlu0 %1184
    %v1186 = vmax.f32 %v1185, 1e-24
    %v1187 = vrsqrt.pop %v1186
    %v1188 = vmul.f32 %v1180, %v1187
    %v1189 = vld [vmem:[%s6] sm:$0xff]
    %v1190 = vld [vmem:[%s6 + $0x8] sm:$0xff]
    %v1191 = vld [vmem:[%s6 + $0x10] sm:$0xff]
    %v1192 = vld [vmem:[%s6 + $0x18] sm:$0xff]
    %v1194 = vsel %vm1104, %v1188, 0
    %1196 = vmatprep.subr.mxu0 0.0
    %1197 = vmatpush1.msra.mxu0 %v1189
    %1198 = vmatprep.subr.mxu0 0.0
    %1199 = vmatpush1.msra.mxu0 %v1190
    %1200 = vmatprep.subr.mxu0 0.0
    %1201 = vmatpush1.msra.mxu0 %v1191
    %1202 = vmatprep.subr.mxu0 0.0
    %1203 = vmatpush1.msra.mxu0 %v1192
    %1204 = vmatprep.subr.mxu0 0.0
    %1205 = vmatpush1.msra.mxu0 0.0
    %1206 = vmatprep.subr.mxu0 0.0
    %1207 = vmatpush1.msra.mxu0 0.0
    %1208 = vmatprep.subr.mxu0 0.0
    %1209 = vmatpush1.msra.mxu0 0.0
    %1210 = vmatprep.subr.mxu0 0.0
    %1211 = vmatpush1.msra.mxu0 0.0
    %1212 = vmatprep.subr.mxu0 0.0
    %1213 = vmatpush1.msra.mxu0 0.0
    %1214 = vmatprep.subr.mxu0 0.0
    %1215 = vmatpush1.msra.mxu0 0.0
    %1216 = vmatprep.subr.mxu0 0.0
    %1217 = vmatpush1.msra.mxu0 0.0
    %1218 = vmatprep.subr.mxu0 0.0
    %1219 = vmatpush1.msra.mxu0 0.0
    %1220 = vmatprep.subr.mxu0 0.0
    %1221 = vmatpush1.msra.mxu0 0.0
    %1222 = vmatprep.subr.mxu0 0.0
    %1223 = vmatpush1.msra.mxu0 0.0
    %1224 = vmatprep.subr.mxu0 0.0
    %1225 = vmatpush1.msra.mxu0 0.0
    %1226 = vmatprep.subr.mxu0 0.0
    %1227 = vmatpush1.msra.mxu0 0.0
    %1228 = vmatprep.subr.mxu0 0.0
    %1229 = vmatpush1.msra.mxu0 0.0
    %1230 = vmatprep.subr.mxu0 0.0
    %1231 = vmatpush1.msra.mxu0 0.0
    %1232 = vmatprep.subr.mxu0 0.0
    %1233 = vmatpush1.msra.mxu0 0.0
    %1234 = vmatprep.subr.mxu0 0.0
    %1235 = vmatpush1.msra.mxu0 0.0
    %1236 = vmatprep.subr.mxu0 0.0
    %1237 = vmatpush1.msra.mxu0 0.0
    %1238 = vmatprep.subr.mxu0 0.0
    %1239 = vmatpush1.msra.mxu0 0.0
    %1240 = vmatprep.subr.mxu0 0.0
    %1241 = vmatpush1.msra.mxu0 0.0
    %1242 = vmatprep.subr.mxu0 0.0
    %1243 = vmatpush1.msra.mxu0 0.0
    %1244 = vmatprep.subr.mxu0 0.0
    %1245 = vmatpush1.msra.mxu0 0.0
    %1246 = vmatprep.subr.mxu0 0.0
    %1247 = vmatpush1.msra.mxu0 0.0
    %1248 = vmatprep.subr.mxu0 0.0
    %1249 = vmatpush1.msra.mxu0 0.0
    %1250 = vmatprep.subr.mxu0 0.0
    %1251 = vmatpush1.msra.mxu0 0.0
    %1252 = vmatprep.subr.mxu0 0.0
    %1253 = vmatpush1.msra.mxu0 0.0
    %1254 = vmatprep.subr.mxu0 0.0
    %1255 = vmatpush1.msra.mxu0 0.0
    %1256 = vmatprep.subr.mxu0 0.0
    %1257 = vmatpush1.msra.mxu0 0.0
    %1258 = vmatprep.subr.mxu0 0.0
    %1259 = vmatpush1.msra.mxu0 0.0
    %1260 = vmatprep.mubr.f32.mxu0 0.0
    %1261 = vmatmul.mubr.f32.gmra.mrb[0].mxu0 %v1194
    %v1262 = vpop.f32.mrb[0].mxu0
    %v1263 = vadd.f32 0.0, %v1262
    %v1264 = vpop.f32.mrb[0].mxu0
    %1265 = vdwg.mxu0
    %1266 = vst [vmem:[#allocation2] sm:$0x3] %v1263
    // Predicated region
    $region30: #{tpu_custom_call.1} parent=1 // pred_check
      _
    $region31: #{tpu_custom_call.1} parent=1 // pred_check_branch
      %1268 = sbr.rel (0) target = $region33
    $region32: #{tpu_custom_call.1} parent=1 // pred_region
      %s1270 = ssub.s32 32, 32
      %1271 = vsyncadd [#allocation3], %s1270
      %s1273 = sshll.u32 [#allocation2], 4
      %s1274 = int_to_ptr.vmem [resolvable:$true] %s1273
      %1276 = dma.vmem_to_hbm [thread:$0]  %s1274, 32, %s7, [#allocation3]
    $region33: #{tpu_custom_call.1} parent=1 // pred_fallthru
      _
    // Predicated region
    $region34: #{tpu_custom_call.1} parent=1 // pred_check
      _
    $region35: #{tpu_custom_call.1} parent=1 // pred_check_branch
      %1278 = sbr.rel (0) target = $region37
    $region36: #{tpu_custom_call.1} parent=1 // pred_region
      %1279 = dma.done [#allocation3], 32
    $region37: #{tpu_custom_call.1} parent=1 // pred_fallthru
      _
    %1280 = vsyncpa [#allocation3], 1

</llo_original>
